<compile_context>
chip_gen: v5e
topology: v5e:2x2
jax: 0.10.0
libtpu: 0.0.40
codegen_flags: <defaults>
</compile_context>

<pallas_src>
import functools
import math

import jax
import jax.numpy as jnp
from jax.experimental import pallas as pl
from jax.experimental.pallas import tpu as pltpu

_NEG_BIG = -1e9         # additive bias for masked keys (matches HF additive mask)
_VMEM_LIMIT = 64 * 1024 * 1024


def _fit(dim, desired):
    """Largest of {desired, desired//2, 256, 128} that evenly divides dim, else the full dim."""
    for t in (desired, desired // 2, 256, 128):
        if t and dim >= t and dim % t == 0:
            return t
    return dim


# --------------------- matmul with fused residual add (K-accumulated) ---------------------

def _matmul_res_kernel(x_ref, w_ref, r_ref, o_ref, acc_ref):
    @pl.when(pl.program_id(2) == 0)
    def _init():
        acc_ref[...] = jnp.zeros(acc_ref.shape, jnp.float32)

    acc_ref[...] += jnp.dot(x_ref[...], w_ref[...],
                            preferred_element_type=jnp.float32)

    @pl.when(pl.program_id(2) == pl.num_programs(2) - 1)
    def _fin():
        o_ref[...] = (acc_ref[...] + r_ref[...].astype(jnp.float32)).astype(o_ref.dtype)


def pallas_matmul_residual(x, w, res, *, tm=512, tn=512, tk=512):
    """res + x @ w.  x: [M, K] bf16, w: [K, N] bf16, res: [M, N] bf16."""
    M, K = x.shape
    K2, N = w.shape
    assert K == K2 and res.shape == (M, N)
    tm, tn, tk = _fit(M, tm), _fit(N, tn), _fit(K, tk)
    # TODO(synk): on v5e, add pipeline_mode=pl.Buffered(3) on the weight spec if DMA is exposed.
    return pl.pallas_call(
        _matmul_res_kernel,
        out_shape=jax.ShapeDtypeStruct((M, N), res.dtype),
        grid=(M // tm, N // tn, K // tk),
        in_specs=[
            pl.BlockSpec((tm, tk), lambda i, j, k: (i, k)),
            pl.BlockSpec((tk, tn), lambda i, j, k: (k, j)),
            pl.BlockSpec((tm, tn), lambda i, j, k: (i, j)),
        ],
        out_specs=pl.BlockSpec((tm, tn), lambda i, j, k: (i, j)),
        scratch_shapes=[pltpu.VMEM((tm, tn), jnp.float32)],
        compiler_params=pltpu.CompilerParams(
            dimension_semantics=("parallel", "parallel", "arbitrary"),
            vmem_limit_bytes=_VMEM_LIMIT),
    )(x, w, res)


# --------------------- fused RMSNorm + projection (norm cached per row block) ---------------------

def _rms_matmul_kernel(x_ref, g_ref, w_ref, o_ref, h_ref, *, eps):
    # Normalize the (tm, K) row block ONCE (at the first N tile) and reuse for all j.
    @pl.when(pl.program_id(1) == 0)
    def _norm():
        x = x_ref[...].astype(jnp.float32)
        var = jnp.mean(x * x, axis=-1, keepdims=True)
        h_ref[...] = ((x * jax.lax.rsqrt(var + eps))
                      * g_ref[...].astype(jnp.float32)).astype(h_ref.dtype)

    o_ref[...] = jnp.dot(h_ref[...], w_ref[...],
                         preferred_element_type=jnp.float32).astype(o_ref.dtype)


def pallas_rmsnorm_matmul(x, gamma, w, *, tm=256, tn=512, eps=1e-6, out_dtype=None):
    """RMSNorm(x)*gamma @ w.  x: [M, K], gamma: [K], w: [K, N]."""
    M, K = x.shape
    K2, N = w.shape
    assert K == K2
    out_dtype = out_dtype or x.dtype
    tm, tn = _fit(M, tm), _fit(N, tn)
    return pl.pallas_call(
        functools.partial(_rms_matmul_kernel, eps=eps),
        out_shape=jax.ShapeDtypeStruct((M, N), out_dtype),
        grid=(M // tm, N // tn),
        in_specs=[
            pl.BlockSpec((tm, K), lambda i, j: (i, 0)),
            pl.BlockSpec((1, K), lambda i, j: (0, 0)),
            pl.BlockSpec((K, tn), lambda i, j: (0, j)),
        ],
        out_specs=pl.BlockSpec((tm, tn), lambda i, j: (i, j)),
        scratch_shapes=[pltpu.VMEM((tm, K), x.dtype)],   # cached normalized rows
        # j must be "arbitrary" so every row block sees its j==0 (norm) step first.
        compiler_params=pltpu.CompilerParams(
            dimension_semantics=("parallel", "arbitrary"),
            vmem_limit_bytes=_VMEM_LIMIT),
    )(x, gamma.reshape(1, K), w)


# --------------------- fused RMSNorm + SwiGLU MLP + residual ---------------------

def _rms_swiglu_kernel(x_ref, g_ref, wg_ref, wu_ref, wd_ref, o_ref, h_ref, acc_ref, *, eps):
    @pl.when(pl.program_id(1) == 0)
    def _init():
        x = x_ref[...].astype(jnp.float32)
        var = jnp.mean(x * x, axis=-1, keepdims=True)
        h_ref[...] = ((x * jax.lax.rsqrt(var + eps))
                      * g_ref[...].astype(jnp.float32)).astype(h_ref.dtype)
        acc_ref[...] = jnp.zeros(acc_ref.shape, jnp.float32)

    h = h_ref[...]                                                   # cached, bf16
    gate = jnp.dot(h, wg_ref[...], preferred_element_type=jnp.float32)
    up = jnp.dot(h, wu_ref[...], preferred_element_type=jnp.float32)
    act = (gate * jax.nn.sigmoid(gate)) * up                         # SiLU(gate) * up, f32
    acc_ref[...] += jnp.dot(act.astype(wd_ref.dtype), wd_ref[...],
                            preferred_element_type=jnp.float32)

    @pl.when(pl.program_id(1) == pl.num_programs(1) - 1)
    def _fin():
        # fused residual add: output = x + down(SiLU(gate) * up)
        o_ref[...] = (acc_ref[...] + x_ref[...].astype(jnp.float32)).astype(o_ref.dtype)


def pallas_rmsnorm_swiglu(x, gamma, wg, wu, wd, *, tm=256, ti=512, eps=1e-6):
    """x + down( SiLU(RMSNorm(x)@Wg) * (RMSNorm(x)@Wu) ), tiled over the intermediate dim.

    v7x note: with D=4096 use ti=256 (64 MiB VMEM) to leave double-buffer headroom.
    """
    M, D = x.shape
    _, I = wg.shape
    tm, ti = _fit(M, tm), _fit(I, ti)
    return pl.pallas_call(
        functools.partial(_rms_swiglu_kernel, eps=eps),
        out_shape=jax.ShapeDtypeStruct((M, D), x.dtype),
        grid=(M // tm, I // ti),
        in_specs=[
            pl.BlockSpec((tm, D), lambda i, l: (i, 0)),
            pl.BlockSpec((1, D), lambda i, l: (0, 0)),
            pl.BlockSpec((D, ti), lambda i, l: (0, l)),
            pl.BlockSpec((D, ti), lambda i, l: (0, l)),
            pl.BlockSpec((ti, D), lambda i, l: (l, 0)),
        ],
        out_specs=pl.BlockSpec((tm, D), lambda i, l: (i, 0)),
        scratch_shapes=[pltpu.VMEM((tm, D), x.dtype),        # cached normalized rows
                        pltpu.VMEM((tm, D), jnp.float32)],   # down-proj accumulator
        compiler_params=pltpu.CompilerParams(
            dimension_semantics=("parallel", "arbitrary"),
            vmem_limit_bytes=_VMEM_LIMIT),
    )(x, gamma.reshape(1, D), wg, wu, wd)


# --------------------- fused RoPE (+ q pre-scaling), natural [B, S, H, Dh] layout ---------------------

def _rope_kernel(q_ref, k_ref, cos_ref, sin_ref, qo_ref, ko_ref, *, scale):
    ts, dh = cos_ref.shape
    half = dh // 2
    cos = cos_ref[...].reshape(ts, 1, dh)                    # broadcast over heads
    sin = sin_ref[...].reshape(ts, 1, dh)

    def rotate_half(x):
        x1 = x[..., :half]
        x2 = x[..., half:]
        return jnp.concatenate([-x2, x1], axis=-1)

    q = q_ref[0].astype(jnp.float32)                         # (ts, H, Dh)
    k = k_ref[0].astype(jnp.float32)
    qo_ref[0] = ((q * cos + rotate_half(q) * sin) * scale).astype(qo_ref.dtype)
    ko_ref[0] = (k * cos + rotate_half(k) * sin).astype(ko_ref.dtype)


def pallas_rope(q, k, cos, sin, *, scale, ts=256):
    """Apply RoPE to q and k ([B, S, H, Dh] bf16); q is additionally scaled by 1/sqrt(Dh)."""
    B, S, H, Dh = q.shape
    ts = _fit(S, ts)
    qkspec = pl.BlockSpec((1, ts, H, Dh), lambda b, si: (b, si, 0, 0))
    cspec = pl.BlockSpec((ts, Dh), lambda b, si: (si, 0))
    return pl.pallas_call(
        functools.partial(_rope_kernel, scale=scale),
        out_shape=(jax.ShapeDtypeStruct(q.shape, q.dtype),
                   jax.ShapeDtypeStruct(k.shape, k.dtype)),
        grid=(B, S // ts),
        in_specs=[qkspec, qkspec, cspec, cspec],
        out_specs=(qkspec, qkspec),
        compiler_params=pltpu.CompilerParams(
            dimension_semantics=("parallel", "parallel")),
    )(q, k, cos, sin)


# --------------------- flash attention: natural layout, causal-tile skip, additive mask ---------------------

def _flash_attn_kernel(mask_ref, q_ref, k_ref, v_ref, o_ref, m_sc, l_sc, acc_sc):
    qi = pl.program_id(1)
    kv = pl.program_id(2)
    _, tq, H, dh = q_ref.shape
    tk = k_ref.shape[1]

    @pl.when(kv == 0)
    def _init():
        m_sc[...] = jnp.full(m_sc.shape, -1e30, jnp.float32)
        l_sc[...] = jnp.zeros(l_sc.shape, jnp.float32)
        acc_sc[...] = jnp.zeros(acc_sc.shape, jnp.float32)

    # Skip kv tiles that are entirely above the causal diagonal for this q tile.
    @pl.when(kv * tk <= (qi + 1) * tq - 1)
    def _body():
        q_pos = qi * tq + jax.lax.broadcasted_iota(jnp.int32, (tq, tk), 0)
        k_pos = kv * tk + jax.lax.broadcasted_iota(jnp.int32, (tq, tk), 1)
        key_ok = mask_ref[...].reshape(1, tk) > 0
        bias = jnp.where((q_pos >= k_pos) & key_ok, 0.0, _NEG_BIG).astype(jnp.float32)

        for h in range(H):                                   # static head loop (unrolled)
            q_h = q_ref[0, :, h, :]                          # (tq, dh) bf16, roped + pre-scaled
            k_h = k_ref[0, :, h, :]
            v_h = v_ref[0, :, h, :]
            s = jnp.einsum("qd,kd->qk", q_h, k_h,
                           preferred_element_type=jnp.float32) + bias
            m_prev = m_sc[h]
            m_new = jnp.maximum(m_prev, jnp.max(s, axis=-1, keepdims=True))
            alpha = jnp.exp(m_prev - m_new)
            p = jnp.exp(s - m_new)
            l_sc[h] = alpha * l_sc[h] + jnp.sum(p, axis=-1, keepdims=True)
            acc_sc[h] = alpha * acc_sc[h] + jnp.dot(
                p.astype(v_h.dtype), v_h, preferred_element_type=jnp.float32)
            m_sc[h] = m_new

    @pl.when(kv == pl.num_programs(2) - 1)
    def _fin():
        for h in range(H):
            out = acc_sc[h] * pl.reciprocal(l_sc[h], approx=True)
            o_ref[0, :, h, :] = out.astype(o_ref.dtype)


def pallas_flash_attention(q, k, v, mask3, *, tq=128, tk=256):
    """q/k/v: [B, S, H, Dh] bf16 (q already scaled), mask3: [B, 1, S] int32 -> [B, S, H, Dh].

    tk=256 fills the 256-deep MXU on v6e/v7x; use tk=128 on v5e.
    """
    B, S, H, Dh = q.shape
    tq, tk = _fit(S, tq), _fit(S, tk)
    return pl.pallas_call(
        _flash_attn_kernel,
        out_shape=jax.ShapeDtypeStruct((B, S, H, Dh), q.dtype),
        grid=(B, S // tq, S // tk),
        in_specs=[
            pl.BlockSpec((1, 1, tk), lambda b, qi, ki: (b, 0, ki)),
            pl.BlockSpec((1, tq, H, Dh), lambda b, qi, ki: (b, qi, 0, 0)),
            pl.BlockSpec((1, tk, H, Dh), lambda b, qi, ki: (b, ki, 0, 0)),
            pl.BlockSpec((1, tk, H, Dh), lambda b, qi, ki: (b, ki, 0, 0)),
        ],
        out_specs=pl.BlockSpec((1, tq, H, Dh), lambda b, qi, ki: (b, qi, 0, 0)),
        scratch_shapes=[
            pltpu.VMEM((H, tq, 1), jnp.float32),     # running max (per head)
            pltpu.VMEM((H, tq, 1), jnp.float32),     # running denom
            pltpu.VMEM((H, tq, Dh), jnp.float32),    # output accumulator
        ],
        compiler_params=pltpu.CompilerParams(
            dimension_semantics=("parallel", "parallel", "arbitrary")),
    )(mask3, q, k, v)


# --------------------------------- JAX glue ---------------------------------

def make_rope_tables(seq_len, head_dim):
    half = head_dim // 2
    inv_freq = 1.0 / (10000.0 ** (jnp.arange(half, dtype=jnp.float32) / half))
    freqs = jnp.outer(jnp.arange(seq_len, dtype=jnp.float32), inv_freq)     # [S, half]
    cos = jnp.concatenate([jnp.cos(freqs)] * 2, axis=-1)                    # [S, Dh]
    sin = jnp.concatenate([jnp.sin(freqs)] * 2, axis=-1)
    return cos, sin


def llama_decoder_layer(x, layer, mask3, rope_cos, rope_sin, heads):
    B, S, D = x.shape
    hd = D // heads
    x2 = x.reshape(B * S, D)

    # fused RMSNorm + QKV projection (Wq|Wk|Wv concatenated into one [D, 3D] weight)
    qkv = pallas_rmsnorm_matmul(x2, layer["ln1"], layer["wqkv"])            # [B*S, 3D]
    q, k, v = jnp.split(qkv, 3, axis=-1)
    q = q.reshape(B, S, heads, hd)
    k = k.reshape(B, S, heads, hd)
    v = v.reshape(B, S, heads, hd)

    # fused RoPE (+ 1/sqrt(hd) folded into q); no head transposes anywhere
    q, k = pallas_rope(q, k, rope_cos, rope_sin, scale=1.0 / math.sqrt(hd))

    attn = pallas_flash_attention(q, k, v, mask3)                           # [B, S, H, Dh]
    attn = attn.reshape(B * S, D)

    # wo projection with the residual add fused into the finalize step
    x2 = pallas_matmul_residual(attn, layer["wo"], x2)
    # RMSNorm + SwiGLU MLP with the residual add fused into the finalize step
    # NOTE: residual stream is bf16 end-to-end (matches HF bf16 Llama; small drift vs fp32).
    x2 = pallas_rmsnorm_swiglu(x2, layer["ln2"],
                               layer["wg"], layer["wu"], layer["wd"])
    return x2.reshape(B, S, D)


def kge_llama_forward(params, input_ids, attention_mask, labels, query_ids,
                      entity_ids, *, query_holder, entity_holder, pad_token_id,
                      heads):
    B, S = input_ids.shape
    top_k = entity_ids.shape[1]
    D = params["embed_tokens"].shape[1]

    # --- kge_model(query_ids, entity_ids.view(-1)): lookup + linear adapter ---
    # Tiny M (2 .. few hundred); XLA handles these better than a pallas_call launch.
    q_raw = params["kge_query_emb"][query_ids]                              # [B, kge_dim]
    e_raw = params["kge_entity_emb"][entity_ids.reshape(-1)]                # [B*top_k, kge_dim]
    query_embeds = jnp.dot(q_raw, params["kge_adapter"],
                           preferred_element_type=jnp.float32)              # [B, D]
    entity_embeds = jnp.dot(e_raw, params["kge_adapter"],
                            preferred_element_type=jnp.float32)             # [B*top_k, D]

    # --- placeholder positions (torch.nonzero row-major order) ---
    # Assumes exactly one [QUERY] and exactly top_k [ENTITY] placeholders per row.
    q_mask = input_ids == query_holder
    e_mask = input_ids == entity_holder
    qr, qc = jnp.nonzero(q_mask, size=B)
    er, ec = jnp.nonzero(e_mask, size=B * top_k)

    # --- replace placeholders with pad id, embed, scatter KGE embeddings ---
    ids = jnp.where(q_mask | e_mask, pad_token_id, input_ids)
    input_emb = params["embed_tokens"][ids]                                 # [B, S, D] bf16
    input_emb = input_emb.at[qr, qc].set(query_embeds.astype(input_emb.dtype))
    input_emb = input_emb.at[er, ec].set(entity_embeds.astype(input_emb.dtype))

    # padding mask carried as a tiny [B, 1, S] int tensor; causal mask built in-kernel
    mask3 = attention_mask.astype(jnp.int32).reshape(B, 1, S)

    # RoPE tables hoisted out of the layer loop
    rope_cos, rope_sin = make_rope_tables(S, D // heads)

    x = input_emb
    for layer in params["layers"]:
        x = llama_decoder_layer(x, layer, mask3, rope_cos, rope_sin, heads)

    # fused final RMSNorm + lm_head (vocab-tiled, norm computed once per row block)
    logits = pallas_rmsnorm_matmul(
        x.reshape(B * S, D), params["final_norm"], params["lm_head"],
        out_dtype=jnp.float32).reshape(B, S, -1)                            # [B, S, vocab]

    # shifted cross-entropy (ignore_index = -100), as in HF CausalLMOutputWithPast
    # TODO(synk): a vocab-tiled fused LM-head+CE kernel would remove the [B,S,vocab] f32
    # HBM round trip, but the module contract returns full logits so they are kept here.
    shift_logits = logits[:, :-1, :]
    shift_labels = labels[:, 1:]
    valid = shift_labels != -100
    safe = jnp.where(valid, shift_labels, 0)
    logp = jax.nn.log_softmax(shift_logits, axis=-1)
    nll = -jnp.take_along_axis(logp, safe[..., None], axis=-1)[..., 0]
    loss = jnp.sum(jnp.where(valid, nll, 0.0)) / jnp.maximum(jnp.sum(valid), 1)

    return {"loss": loss, "logits": logits}


# --------------------------------- parameter init ---------------------------------

def init_params(key, *, vocab, hidden, heads, inter, kge_dim, n_layers,
                n_queries, n_entities):
    def nrm(k, shape, scale=0.02):
        return (scale * jax.random.normal(k, shape, dtype=jnp.float32)).astype(jnp.bfloat16)

    keys = iter(jax.random.split(key, 16 + 8 * n_layers))
    params = {
        "embed_tokens": nrm(next(keys), (vocab, hidden)),
        "kge_query_emb": nrm(next(keys), (n_queries, kge_dim)),
        "kge_entity_emb": nrm(next(keys), (n_entities, kge_dim)),
        "kge_adapter": nrm(next(keys), (kge_dim, hidden)),
        "final_norm": jnp.ones((hidden,), jnp.bfloat16),
        "lm_head": nrm(next(keys), (hidden, vocab)),
        "layers": [],
    }
    for _ in range(n_layers):
        params["layers"].append({
            "ln1": jnp.ones((hidden,), jnp.bfloat16),
            "wqkv": nrm(next(keys), (hidden, 3 * hidden)),     # fused Wq|Wk|Wv
            "wo": nrm(next(keys), (hidden, hidden)),
            "ln2": jnp.ones((hidden,), jnp.bfloat16),
            "wg": nrm(next(keys), (hidden, inter)),
            "wu": nrm(next(keys), (hidden, inter)),
            "wd": nrm(next(keys), (inter, hidden)),
        })
    return params


# -------------------------------------- main --------------------------------------

if __name__ == "__main__":
    B, S, top_k = 2, 16, 2
    vocab, hidden, heads, inter = 256, 64, 2, 128
    kge_dim, n_layers = 32, 2
    n_queries, n_entities = 10, 20

    pad_token_id = 0
    query_holder = vocab - 2     # synthetic id for '[QUERY]'
    entity_holder = vocab - 1    # synthetic id for '[ENTITY]'

    key = jax.random.PRNGKey(0)
    kp, kid = jax.random.split(key)
    params = init_params(kp, vocab=vocab, hidden=hidden, heads=heads, inter=inter,
                         kge_dim=kge_dim, n_layers=n_layers,
                         n_queries=n_queries, n_entities=n_entities)

    # input_ids with one [QUERY] and top_k [ENTITY] placeholders per row
    input_ids = jax.random.randint(kid, (B, S), 1, vocab - 2, dtype=jnp.int32)
    input_ids = input_ids.at[:, 1].set(query_holder)
    input_ids = input_ids.at[:, 2].set(entity_holder)
    input_ids = input_ids.at[:, 3].set(entity_holder)

    attention_mask = jnp.ones((B, S), jnp.int32).at[1, -3:].set(0)
    labels = jnp.where(attention_mask == 1, input_ids, -100)

    query_ids = jnp.array([1, 3], jnp.int32)                  # [B]
    entity_ids = jnp.array([[2, 5], [7, 9]], jnp.int32)       # [B, top_k]

    out = kge_llama_forward(params, input_ids, attention_mask, labels,
                            query_ids, entity_ids,
                            query_holder=query_holder,
                            entity_holder=entity_holder,
                            pad_token_id=pad_token_id,
                            heads=heads)

    jax.block_until_ready(out["loss"])
    jax.block_until_ready(out["logits"])
    assert out["logits"].shape == (B, S, vocab)
    assert out["loss"].shape == ()
    assert bool(jnp.isfinite(out["loss"]))
    # TODO(synk): generate() (autoregressive decode loop) and save_pretrained()
    # (checkpoint IO) have no Pallas equivalent and are not implemented.
    print("KERNEL_OK")
</pallas_src>

<mosaic_0001>
module attributes {stable_mosaic.version = 11 : i64} {
  func.func @_rms_matmul_kernel(%arg0: i32, %arg1: i32, %arg2: memref<32x64xbf16, #tpu.memory_space<vmem>>, %arg3: memref<1x64xbf16, #tpu.memory_space<vmem>>, %arg4: memref<64x192xbf16, #tpu.memory_space<vmem>>, %arg5: memref<32x192xbf16, #tpu.memory_space<vmem>>, %arg6: memref<32x64xbf16, #tpu.memory_space<vmem>>) attributes {dimension_semantics = [#tpu.dimension_semantics<parallel>, #tpu.dimension_semantics<arbitrary>], iteration_bounds = array<i64: 1, 1>, scalar_prefetch = 0 : i64, scratch_operands = 1 : i64, tpu.core_type = #tpu.core_type<tc>, window_params = [{transform_indices = @transform_0, window_bounds = array<i64: 32, 64>}, {pipeline_mode = #tpu.pipeline_mode<synchronous>, transform_indices = @transform_1, window_bounds = array<i64: 1, 64>}, {transform_indices = @transform_2, window_bounds = array<i64: 64, 192>}, {transform_indices = @transform_3, window_bounds = array<i64: 32, 192>}]} {
    %c0_i32 = arith.constant 0 : i32
    %0 = arith.cmpi eq, %arg1, %c0_i32 : i32
    %1 = arith.extui %0 : i1 to i32
    %c0_i32_0 = arith.constant 0 : i32
    %2 = arith.cmpi ne, %1, %c0_i32_0 : i32
    scf.if %2 {
      %c0_6 = arith.constant 0 : index
      %c0_7 = arith.constant 0 : index
      %8 = vector.load %arg2[%c0_6, %c0_7] : memref<32x64xbf16, #tpu.memory_space<vmem>>, vector<32x64xbf16>
      %9 = arith.extf %8 : vector<32x64xbf16> to vector<32x64xf32>
      %10 = arith.mulf %9, %9 : vector<32x64xf32>
      %cst_8 = arith.constant dense<0.000000e+00> : vector<32xf32>
      %11 = vector.multi_reduction <add>, %10, %cst_8 [1] : vector<32x64xf32> to vector<32xf32>
      %12 = vector.shape_cast %11 : vector<32xf32> to vector<32x1xf32>
      %cst_9 = arith.constant 6.400000e+01 : f32
      %13 = vector.broadcast %cst_9 : f32 to vector<32x1xf32>
      %14 = arith.divf %12, %13 : vector<32x1xf32>
      %cst_10 = arith.constant 9.99999997E-7 : f32
      %15 = vector.broadcast %cst_10 : f32 to vector<32x1xf32>
      %16 = arith.addf %14, %15 : vector<32x1xf32>
      %17 = math.rsqrt %16 : vector<32x1xf32>
      %18 = vector.broadcast %17 : vector<32x1xf32> to vector<32x64xf32>
      %19 = arith.mulf %9, %18 : vector<32x64xf32>
      %c0_11 = arith.constant 0 : index
      %c0_12 = arith.constant 0 : index
      %20 = vector.load %arg3[%c0_11, %c0_12] : memref<1x64xbf16, #tpu.memory_space<vmem>>, vector<1x64xbf16>
      %21 = arith.extf %20 : vector<1x64xbf16> to vector<1x64xf32>
      %22 = vector.broadcast %21 : vector<1x64xf32> to vector<32x64xf32>
      %23 = arith.mulf %19, %22 : vector<32x64xf32>
      %24 = arith.truncf %23 : vector<32x64xf32> to vector<32x64xbf16>
      %c0_13 = arith.constant 0 : index
      %c0_14 = arith.constant 0 : index
      %25 = vector.load %arg6[%c0_13, %c0_14] : memref<32x64xbf16, #tpu.memory_space<vmem>>, vector<32x64xbf16>
      tpu.vector_store %arg6[%c0_13, %c0_14], %24 {strides = array<i32>} : memref<32x64xbf16, #tpu.memory_space<vmem>>, vector<32x64xbf16>,
    } else {
    }
    %c0 = arith.constant 0 : index
    %c0_1 = arith.constant 0 : index
    %3 = vector.load %arg6[%c0, %c0_1] : memref<32x64xbf16, #tpu.memory_space<vmem>>, vector<32x64xbf16>
    %c0_2 = arith.constant 0 : index
    %c0_3 = arith.constant 0 : index
    %4 = vector.load %arg4[%c0_2, %c0_3] : memref<64x192xbf16, #tpu.memory_space<vmem>>, vector<64x192xbf16>
    %cst = arith.constant dense<0.000000e+00> : vector<32x192xf32>
    %5 = tpu.matmul %3, %4, %cst {dimension_numbers = #tpu.dot_dimension_numbers<[1], [0], [0], [1], [0, 0, 1, 1], [], []>} : vector<32x64xbf16>, vector<64x192xbf16>, vector<32x192xf32> -> vector<32x192xf32>
    %6 = arith.truncf %5 : vector<32x192xf32> to vector<32x192xbf16>
    %c0_4 = arith.constant 0 : index
    %c0_5 = arith.constant 0 : index
    %7 = vector.load %arg5[%c0_4, %c0_5] : memref<32x192xbf16, #tpu.memory_space<vmem>>, vector<32x192xbf16>
    tpu.vector_store %arg5[%c0_4, %c0_5], %6 {strides = array<i32>} : memref<32x192xbf16, #tpu.memory_space<vmem>>, vector<32x192xbf16>,
    return
  }
  func.func @transform_0(%arg0: i32, %arg1: i32) -> (i32, i32) {
    %c0_i32 = arith.constant 0 : i32
    %c0_i32_0 = arith.constant 0 : i32
    return %arg0, %c0_i32 : i32, i32
  }
  func.func @transform_1(%arg0: i32, %arg1: i32) -> (i32, i32) {
    %c0_i32 = arith.constant 0 : i32
    %c0_i32_0 = arith.constant 0 : i32
    %c0_i32_1 = arith.constant 0 : i32
    return %c0_i32, %c0_i32_0 : i32, i32
  }
  func.func @transform_2(%arg0: i32, %arg1: i32) -> (i32, i32) {
    %c0_i32 = arith.constant 0 : i32
    %c0_i32_0 = arith.constant 0 : i32
    return %c0_i32, %arg1 : i32, i32
  }
  func.func @transform_3(%arg0: i32, %arg1: i32) -> (i32, i32) {
    %c0_i32 = arith.constant 0 : i32
    return %arg0, %arg1 : i32, i32
  }
}

</mosaic_0001>

<llo_original>
// kernel: tpu_custom_call.1
$region0: #{tpu_custom_call.1}
  #allocation0 [shape = 'u32[]', space=smem, size = 0x4, offset = 0x4, fixed_abs, tag = 'smem constant byte address 0x4 - core index']
  #allocation1 [shape = 'u32[72,128]{1,0:T(1,128)}', space=vmem, size = 0x9000, scoped, tag = 'internal scratch']
  #allocation2 [shape = 'bf16[32,64]{1,0:T(8,128)(2,1)}', space=vmem, size = 0x2000, scoped, tag = 'scratch operand']
  %s0 = inlined_call_operand.hbm [shape: bf16[32,64], index: 0, kind: input, shape index: {}]
  %s1 = inlined_call_operand.hbm [shape: bf16[1,64], index: 1, kind: input, shape index: {}]
  %s2 = inlined_call_operand.hbm [shape: bf16[64,192], index: 2, kind: input, shape index: {}]
  %s3 = inlined_call_operand.hbm [shape: bf16[32,192], index: 3, kind: output, shape index: {}]
  %s4 = sld [smem:[#allocation0]]
  $region38: #{tpu_custom_call.1} parent=0
    _
  %s6 = ssub.s32 1, %s4
  %s7 = scalar_select 0, %s6, %s4
  $region1: #{tpu_custom_call.1} parent=0
    #allocation3 [shape = 'u8[8192]{0}', space=vmem, size = 0x2000, scoped, tag = 'input window, operand 0, single buffered']
    #allocation4 [shape = 's32[1]{0}', space=sflag, size = 0x4, scoped, tag = 'scoped memory for tpu_custom_call.1']
    #allocation5 [shape = 's32[1]{0}', space=sflag, size = 0x4, scoped, tag = 'scoped memory for tpu_custom_call.1']
    #allocation6 [shape = 'u8[512]{0}', space=vmem, size = 0x400, scoped, tag = 'input window, operand 1, single buffered']
    #allocation7 [shape = 's32[1]{0}', space=sflag, size = 0x4, scoped, tag = 'scoped memory for tpu_custom_call.1']
    #allocation8 [shape = 'u8[32768]{0}', space=vmem, size = 0x8000, scoped, tag = 'input window, operand 2, single buffered']
    #allocation9 [shape = 'u8[16384]{0}', space=vmem, size = 0x4000, scoped, tag = 'output window, operand 0, single buffered']
    %8 = vsyncpa [#allocation4], 0
    %9 = vsyncpa [#allocation7], 0
    %10 = vsyncpa [#allocation5], 0
    // Predicated region
    $region2: #{tpu_custom_call.1} parent=1 // pred_check
      _
    $region3: #{tpu_custom_call.1} parent=1 // pred_check_branch
      %12 = sbr.rel (0) target = $region5
    $region4: #{tpu_custom_call.1} parent=1 // pred_region
      %14 = vsyncadd [#allocation4], 0
      %s15 = sshll.u32 %s0, 4
      %s16 = int_to_ptr.hbm [resolvable:$true] %s15
      %s17 = sshll.u32 [#allocation3], 4
      %s18 = int_to_ptr.vmem [resolvable:$true] %s17
      %23 = dma.hbm_to_vmem [thread:$0]  %s16, 256, %s18, [#allocation4], 64, 64, 4
    $region5: #{tpu_custom_call.1} parent=1 // pred_fallthru
      _
    // Predicated region
    $region6: #{tpu_custom_call.1} parent=1 // pred_check
      _
    $region7: #{tpu_custom_call.1} parent=1 // pred_check_branch
      %25 = sbr.rel (0) target = $region9
    $region8: #{tpu_custom_call.1} parent=1 // pred_region
      %27 = vsyncadd [#allocation7], 0
      %s29 = sshll.u32 %s1, 4
      %s30 = int_to_ptr.hbm [resolvable:$true] %s29
      %s31 = sshll.u32 [#allocation6], 4
      %s32 = int_to_ptr.vmem [resolvable:$true] %s31
      %34 = dma.hbm_to_vmem [thread:$0]  %s30, 16, %s32, [#allocation7]
    $region9: #{tpu_custom_call.1} parent=1 // pred_fallthru
      _
    // Predicated region
    $region10: #{tpu_custom_call.1} parent=1 // pred_check
      _
    $region11: #{tpu_custom_call.1} parent=1 // pred_check_branch
      %36 = sbr.rel (0) target = $region13
    $region12: #{tpu_custom_call.1} parent=1 // pred_region
      %38 = vsyncadd [#allocation7], 0
      %s39 = sshll.u32 %s2, 4
      %s40 = int_to_ptr.hbm [resolvable:$true] %s39
      %s41 = sshll.u32 [#allocation8], 4
      %s42 = int_to_ptr.vmem [resolvable:$true] %s41
      %47 = dma.hbm_to_vmem [thread:$0]  %s40, 1024, %s42, [#allocation7], 128, 128, 8
    $region13: #{tpu_custom_call.1} parent=1 // pred_fallthru
      _
    // Predicated region
    $region14: #{tpu_custom_call.1} parent=1 // pred_check
      _
    $region15: #{tpu_custom_call.1} parent=1 // pred_check_branch
      %49 = sbr.rel (0) target = $region17
    $region16: #{tpu_custom_call.1} parent=1 // pred_region
      %51 = dma.done [#allocation4], 256
    $region17: #{tpu_custom_call.1} parent=1 // pred_fallthru
      _
    // Predicated region
    $region18: #{tpu_custom_call.1} parent=1 // pred_check
      _
    $region19: #{tpu_custom_call.1} parent=1 // pred_check_branch
      %53 = sbr.rel (0) target = $region21
    $region20: #{tpu_custom_call.1} parent=1 // pred_region
      %55 = dma.done [#allocation7], 16
    $region21: #{tpu_custom_call.1} parent=1 // pred_fallthru
      _
    // Predicated region
    $region22: #{tpu_custom_call.1} parent=1 // pred_check
      _
    $region23: #{tpu_custom_call.1} parent=1 // pred_check_branch
      %57 = sbr.rel (0) target = $region25
    $region24: #{tpu_custom_call.1} parent=1 // pred_region
      %59 = dma.done [#allocation7], 1024
    $region25: #{tpu_custom_call.1} parent=1 // pred_fallthru
      _
    %p61 = scmp.eq.s32.totalorder 0, 0
    // Predicated region
    $region26: #{tpu_custom_call.1} parent=1 // pred_check
      %p62 = pneg %p61
    $region27: #{tpu_custom_call.1} parent=1 // pred_check_branch
      %64 = sbr.rel (%p62) target = $region29
    $region28: #{tpu_custom_call.1} parent=1 // pred_region
      %v65 = vld [vmem:[#allocation3] sm:$0xf]
      %v66 = vld [vmem:[#allocation3 + $0x4] sm:$0xf]
      %v67 = vld [vmem:[#allocation3 + $0x8] sm:$0xf]
      %v68 = vld [vmem:[#allocation3 + $0xc] sm:$0xf]
      %v69 = vunpack.c.l.bf16 %v65
      %v70 = vunpack.c.l.bf16 %v66
      %v71 = vunpack.c.l.bf16 %v67
      %v72 = vunpack.c.l.bf16 %v68
      %v73 = vmul.f32 %v69, %v69
      %v74 = vmul.f32 %v70, %v70
      %v75 = vmul.f32 %v71, %v71
      %v76 = vmul.f32 %v72, %v72
      %vm77 = vcmask 523264
      %v78 = vsel %vm77, %v73, 0.0
      %79 = vadd.xlane.f32.xlu0 %v78
      %v80 = vpop.xlane.xlu0 %79
      %v81 = vsel %vm77, %v74, 0.0
      %82 = vadd.xlane.f32.xlu0 %v81
      %v83 = vpop.xlane.xlu0 %82
      %v84 = vsel %vm77, %v75, 0.0
      %85 = vadd.xlane.f32.xlu0 %v84
      %v86 = vpop.xlane.xlu0 %85
      %v87 = vsel %vm77, %v76, 0.0
      %88 = vadd.xlane.f32.xlu0 %v87
      %v89 = vpop.xlane.xlu0 %88
      %v90 = vrcp.pop 64.0
      %v91 = vmul.f32 64.0, %v90
      %v92 = vsub.f32 1.0, %v91
      %v93 = vmul.f32 %v90, %v92
      %v94 = vadd.f32 %v90, %v93
      %vm95 = vweird.f32 %v90
      %v96 = vsel %vm95, %v90, %v94
      %v97 = vmul.f32 %v80, %v96
      %v98 = vmul.f32 %v83, %v96
      %v99 = vmul.f32 %v86, %v96
      %v100 = vmul.f32 %v89, %v96
      %v101 = vadd.f32 %v97, 1e-06
      %v102 = vadd.f32 %v98, 1e-06
      %v103 = vadd.f32 %v99, 1e-06
      %v104 = vadd.f32 %v100, 1e-06
      %v105 = vrsqrt.pop %v101
      %v106 = vmul.f32 %v105, %v101
      %v107 = vmul.f32 %v106, %v105
      %v108 = vmul.f32 0.5, %v107
      %v109 = vsub.f32 1.5, %v108
      %v110 = vmul.f32 %v105, %v109
      %vm111 = vweird.f32 %v101
      %vm112 = vweird.f32 %v105
      %vm113 = vmor %vm111, %vm112
      %v114 = vsel %vm113, %v105, %v110
      %v115 = vrsqrt.pop %v102
      %v116 = vmul.f32 %v115, %v102
      %v117 = vmul.f32 %v116, %v115
      %v118 = vmul.f32 0.5, %v117
      %v119 = vsub.f32 1.5, %v118
      %v120 = vmul.f32 %v115, %v119
      %vm121 = vweird.f32 %v102
      %vm122 = vweird.f32 %v115
      %vm123 = vmor %vm121, %vm122
      %v124 = vsel %vm123, %v115, %v120
      %v125 = vrsqrt.pop %v103
      %v126 = vmul.f32 %v125, %v103
      %v127 = vmul.f32 %v126, %v125
      %v128 = vmul.f32 0.5, %v127
      %v129 = vsub.f32 1.5, %v128
      %v130 = vmul.f32 %v125, %v129
      %vm131 = vweird.f32 %v103
      %vm132 = vweird.f32 %v125
      %vm133 = vmor %vm131, %vm132
      %v134 = vsel %vm133, %v125, %v130
      %v135 = vrsqrt.pop %v104
      %v136 = vmul.f32 %v135, %v104
      %v137 = vmul.f32 %v136, %v135
      %v138 = vmul.f32 0.5, %v137
      %v139 = vsub.f32 1.5, %v138
      %v140 = vmul.f32 %v135, %v139
      %vm141 = vweird.f32 %v104
      %vm142 = vweird.f32 %v135
      %vm143 = vmor %vm141, %vm142
      %v144 = vsel %vm143, %v135, %v140
      %v145 = vmul.f32 %v69, %v114
      %v146 = vmul.f32 %v70, %v124
      %v147 = vmul.f32 %v71, %v134
      %v148 = vmul.f32 %v72, %v144
      %v149 = vld [vmem:[#allocation6] sm:$0x1]
      %v150 = vunpack.c.l.bf16 %v149
      %v151 = vperm.slane %v150, 0
      %v152 = vmul.f32 %v145, %v151
      %v153 = vmul.f32 %v146, %v151
      %v154 = vmul.f32 %v147, %v151
      %v155 = vmul.f32 %v148, %v151
      %v156 = vpack.c.bf16 %v152, %v152
      %v157 = vpack.c.bf16 %v153, %v153
      %v158 = vpack.c.bf16 %v154, %v154
      %v159 = vpack.c.bf16 %v155, %v155
      %vm160 = vcmask 519168
      %161 = vst.msk [vmem:[#allocation2] sm:$0xf] %vm160, %v156
      %162 = vst.msk [vmem:[#allocation2 + $0x4] sm:$0xf] %vm160, %v157
      %163 = vst.msk [vmem:[#allocation2 + $0x8] sm:$0xf] %vm160, %v158
      %164 = vst.msk [vmem:[#allocation2 + $0xc] sm:$0xf] %vm160, %v159
    $region29: #{tpu_custom_call.1} parent=1 // pred_fallthru
      _
    %v165 = vld [vmem:[#allocation2] sm:$0xf]
    %v166 = vld [vmem:[#allocation2 + $0x4] sm:$0xf]
    %v167 = vld [vmem:[#allocation2 + $0x8] sm:$0xf]
    %v168 = vld [vmem:[#allocation2 + $0xc] sm:$0xf]
    %v169 = vld [vmem:[#allocation8] sm:$0xff]
    %v170 = vld [vmem:[#allocation8 + $0x8] sm:$0xff]
    %v171 = vld [vmem:[#allocation8 + $0x10] sm:$0xff]
    %v172 = vld [vmem:[#allocation8 + $0x18] sm:$0xff]
    %v173 = vld [vmem:[#allocation8 + $0x20] sm:$0xff]
    %v174 = vld [vmem:[#allocation8 + $0x28] sm:$0xff]
    %v175 = vld [vmem:[#allocation8 + $0x30] sm:$0xff]
    %v176 = vld [vmem:[#allocation8 + $0x38] sm:$0xff]
    %v181 = vunpack.c.l.b16 %v165
    %v182 = vunpack.c.l.b16 %v166
    %v183 = vunpack.c.l.b16 %v167
    %v184 = vunpack.c.l.b16 %v168
    %v185 = vpack.c.b16 %v182, %v181
    %v186 = vpack.c.b16 %v184, %v183
    %v195 = vunpack.c.l.b16 %v169
    %v196 = vunpack.c.h.b16 %v169
    %v197 = vunpack.c.l.b16 %v170
    %v198 = vunpack.c.h.b16 %v170
    %v199 = vunpack.c.l.b16 %v171
    %v200 = vunpack.c.h.b16 %v171
    %v201 = vunpack.c.l.b16 %v172
    %v202 = vunpack.c.h.b16 %v172
    %v203 = vunpack.c.l.b16 %v173
    %v204 = vunpack.c.h.b16 %v173
    %v205 = vunpack.c.l.b16 %v174
    %v206 = vunpack.c.h.b16 %v174
    %v207 = vunpack.c.l.b16 %v175
    %v208 = vunpack.c.h.b16 %v175
    %v209 = vunpack.c.l.b16 %v176
    %v210 = vunpack.c.h.b16 %v176
    %v211 = vpack.c.b16 %v197, %v195
    %v212 = vpack.c.b16 %v198, %v196
    %v213 = vpack.c.b16 %v201, %v199
    %v214 = vpack.c.b16 %v202, %v200
    %v215 = vpack.c.b16 %v205, %v203
    %v216 = vpack.c.b16 %v206, %v204
    %v217 = vpack.c.b16 %v209, %v207
    %v218 = vpack.c.b16 %v210, %v208
    %vm227 = vcmask 523264
    %v229 = vsel %vm227, %v185, 0
    %v232 = vsel %vm227, %v186, 0
    %234 = vmatpush.bf16.msra.mxu0 0
    %235 = vmatpush.bf16.msra.mxu0 0
    %236 = vmatpush.bf16.msra.mxu0 0
    %237 = vmatpush.bf16.msra.mxu0 0
    %238 = vmatpush.bf16.msra.mxu0 %v217
    %239 = vmatpush.bf16.msra.mxu0 %v215
    %240 = vmatpush.bf16.msra.mxu0 %v213
    %241 = vmatpush.bf16.msra.mxu0 %v211
    %242 = vmatmul.bf16.gmra.mxu0 %v229
    %v243 = vpop.f32.mrf.mxu0
    %v244 = vadd.f32 0.0, %v243
    %v245 = vpop.f32.mrf.mxu0
    %v246 = vadd.f32 0.0, %v245
    %247 = vmatmul.bf16.gmra.mxu0 %v232
    %v248 = vpop.f32.mrf.mxu0
    %v249 = vadd.f32 0.0, %v248
    %v250 = vpop.f32.mrf.mxu0
    %v251 = vadd.f32 0.0, %v250
    %252 = vdwg.mxu0
    %253 = vmatpush.bf16.msra.mxu0 0
    %254 = vmatpush.bf16.msra.mxu0 0
    %255 = vmatpush.bf16.msra.mxu0 0
    %256 = vmatpush.bf16.msra.mxu0 0
    %257 = vmatpush.bf16.msra.mxu0 %v218
    %258 = vmatpush.bf16.msra.mxu0 %v216
    %259 = vmatpush.bf16.msra.mxu0 %v214
    %260 = vmatpush.bf16.msra.mxu0 %v212
    %261 = vmatmul.bf16.gmra.mxu0 %v229
    %v262 = vpop.f32.mrf.mxu0
    %v263 = vadd.f32 0.0, %v262
    %v264 = vpop.f32.mrf.mxu0
    %v265 = vadd.f32 0.0, %v264
    %266 = vmatmul.bf16.gmra.mxu0 %v232
    %v267 = vpop.f32.mrf.mxu0
    %v268 = vadd.f32 0.0, %v267
    %v269 = vpop.f32.mrf.mxu0
    %v270 = vadd.f32 0.0, %v269
    %271 = vdwg.mxu0
    %v272 = vpack.c.bf16 %v263, %v244
    %v273 = vpack.c.bf16 %v265, %v246
    %v274 = vpack.c.bf16 %v268, %v249
    %v275 = vpack.c.bf16 %v270, %v251
    %vm276 = vcmask 1043456
    %vm277 = vcmask 523268
    %vm278 = vmor %vm277, %vm276
    %279 = vst.msk [vmem:[#allocation9] sm:$0xff] %vm278, %v272
    %280 = vst.msk [vmem:[#allocation9 + $0x8] sm:$0xff] %vm278, %v273
    %281 = vst.msk [vmem:[#allocation9 + $0x10] sm:$0xff] %vm278, %v274
    %282 = vst.msk [vmem:[#allocation9 + $0x18] sm:$0xff] %vm278, %v275
    // Predicated region
    $region30: #{tpu_custom_call.1} parent=1 // pred_check
      _
    $region31: #{tpu_custom_call.1} parent=1 // pred_check_branch
      %284 = sbr.rel (0) target = $region33
    $region32: #{tpu_custom_call.1} parent=1 // pred_region
      %286 = vsyncadd [#allocation5], 0
      %s287 = sshll.u32 [#allocation9], 4
      %s288 = int_to_ptr.vmem [resolvable:$true] %s287
      %s289 = sshll.u32 %s3, 4
      %s290 = int_to_ptr.hbm [resolvable:$true] %s289
      %295 = dma.vmem_to_hbm [thread:$0]  %s288, 512, %s290, [#allocation5], 128, 128, 8
    $region33: #{tpu_custom_call.1} parent=1 // pred_fallthru
      _
    // Predicated region
    $region34: #{tpu_custom_call.1} parent=1 // pred_check
      _
    $region35: #{tpu_custom_call.1} parent=1 // pred_check_branch
      %297 = sbr.rel (0) target = $region37
    $region36: #{tpu_custom_call.1} parent=1 // pred_region
      %299 = dma.done [#allocation5], 512
    $region37: #{tpu_custom_call.1} parent=1 // pred_fallthru
      _
    %300 = vsyncpa [#allocation4], 1
    %301 = vsyncpa [#allocation7], 1
    %302 = vsyncpa [#allocation5], 1

</llo_original>
